<compile_context>
chip_gen: v6e
topology: v6e:2x2x1
jax: 0.10.0
libtpu: 0.0.40
codegen_flags: <defaults>
</compile_context>

<pallas_src>
import functools

import jax
import jax.numpy as jnp
from jax import lax
from jax.experimental import pallas as pl
from jax.experimental.pallas import tpu as pltpu


# ---------------------------------------------------------------------------
# Pallas kernels
# ---------------------------------------------------------------------------
def _noisy_linear_train_kernel(x_ref, xeps_ref, wmu_ref, wsig_ref,
                               eps_out_ref, bias_ref, o_ref,
                               acc_mu_ref, acc_sig_ref, *, tk):
    """grid = (N tiles, K tiles); K is the innermost (reduction) axis."""
    k = pl.program_id(1)

    @pl.when(k == 0)
    def _():
        acc_mu_ref[...] = jnp.zeros_like(acc_mu_ref)
        acc_sig_ref[...] = jnp.zeros_like(acc_sig_ref)

    # x and x*eps_in are fully VMEM-resident; slice out this K chunk.
    start = pl.multiple_of(k * tk, tk)
    xk = x_ref[:, pl.ds(start, tk)]          # [B_p, TK]
    xek = xeps_ref[:, pl.ds(start, tk)]      # [B_p, TK]

    # Contract on K against [TN, TK] weight tiles -> no in-kernel transpose.
    dn = (((1,), (1,)), ((), ()))
    acc_mu_ref[...] += lax.dot_general(
        xk, wmu_ref[...], dn, preferred_element_type=jnp.float32)
    acc_sig_ref[...] += lax.dot_general(
        xek, wsig_ref[...], dn, preferred_element_type=jnp.float32)

    @pl.when(k == pl.num_programs(1) - 1)
    def _():
        o_ref[...] = (acc_mu_ref[...]
                      + eps_out_ref[...] * acc_sig_ref[...]
                      + bias_ref[...]).astype(o_ref.dtype)


def _noisy_linear_eval_kernel(x_ref, wmu_ref, bias_ref, o_ref, acc_ref, *, tk):
    k = pl.program_id(1)

    @pl.when(k == 0)
    def _():
        acc_ref[...] = jnp.zeros_like(acc_ref)

    start = pl.multiple_of(k * tk, tk)
    acc_ref[...] += lax.dot_general(
        x_ref[:, pl.ds(start, tk)], wmu_ref[...],
        (((1,), (1,)), ((), ())), preferred_element_type=jnp.float32)

    @pl.when(k == pl.num_programs(1) - 1)
    def _():
        o_ref[...] = (acc_ref[...] + bias_ref[...]).astype(o_ref.dtype)


# ---------------------------------------------------------------------------
# Wrapper
# ---------------------------------------------------------------------------
def _round_up(x, m):
    return ((x + m - 1) // m) * m


def _choose_tile(dim128, cap):
    """dim128 is a multiple of 128. Returns (tile, padded_dim).

    Pick the largest 128-multiple tile <= cap whose round-up padding wastes at
    most 12.5% extra bytes (t=128 always qualifies with zero waste). Padded dim
    is always a multiple of the returned tile.
    """
    cap = min(cap, dim128)
    best_t, best_pad = 128, dim128
    t = 128
    while t <= cap:
        padded = _round_up(dim128, t)
        if padded * 8 <= dim128 * 9:          # <= 12.5% padding waste
            best_t, best_pad = t, padded
        t += 128
    return best_t, best_pad


@functools.partial(jax.jit, static_argnames=("training", "use_bf16"))
def noisy_linear_forward(x, params, training=True, use_bf16=True):
    """Pallas implementation of NoisyLinear.forward.

    x: [B, in_features] float32
    params: dict from init_noisy_linear. The kernel consumes the *factorized*
        noise vectors (weight_eps_out [N], weight_eps_in [K]) instead of the
        materialized [N, K] weight_epsilon buffer (identical math:
        weight_epsilon == outer(weight_eps_out, weight_eps_in)).
    use_bf16: stream x / weights as bf16 (f32 accumulation). False = f32 path.
    """
    B, in_features = x.shape
    out_features = params["weight_mu"].shape[0]
    out_dtype = x.dtype
    cdt = jnp.bfloat16 if use_bf16 else jnp.float32
    cbytes = 2 if use_bf16 else 4

    # ---- tile sizes & padded dims -----------------------------------------
    in_128 = _round_up(in_features, 128)
    out_128 = _round_up(out_features, 128)
    tk_cap = 1024 if use_bf16 else 512        # bigger K tiles when bytes halve
    TN, out_p = _choose_tile(out_128, 256)    # TN<=256 keeps >=2 parallel N
    TK, in_p = _choose_tile(in_128, tk_cap)   # tiles for v7x's two TCs
    b_align = 16 if use_bf16 else 8           # bf16 sublane tile is 16
    B_p = _round_up(max(B, 1), b_align)
    grid = (out_p // TN, in_p // TK)

    # ---- pad + cast (production: pre-pad / pre-cast params once) ----------
    def pad2(a, r, c):
        return jnp.pad(a, ((0, r - a.shape[0]), (0, c - a.shape[1])))

    def pad_row(v, c):
        return jnp.pad(v, (0, c - v.shape[0])).reshape(1, c)

    x_p = pad2(x.astype(cdt), B_p, in_p)
    wmu = pad2(params["weight_mu"].astype(cdt), out_p, in_p)

    # ---- specs / VMEM budget ------------------------------------------------
    x_spec = pl.BlockSpec((B_p, in_p), lambda n, k: (0, 0))   # fully resident
    w_spec = pl.BlockSpec((TN, TK), lambda n, k: (n, k))
    row_spec = pl.BlockSpec((1, TN), lambda n, k: (0, n))
    o_spec = pl.BlockSpec((B_p, TN), lambda n, k: (0, n))
    out_shape = jax.ShapeDtypeStruct((B_p, out_p), out_dtype)

    n_w = 2 if training else 1                # streamed weight matrices
    n_x = 2 if training else 1                # resident x arrays
    n_acc = 2 if training else 1
    ws = (n_w * 2 * TN * TK * cbytes          # double-buffered weight tiles
          + n_x * B_p * in_p * cbytes         # resident x (+ x*eps_in)
          + 2 * B_p * TN * 4                  # double-buffered output tile
          + n_acc * B_p * TN * 4              # f32 accumulators
          + 8 * 2 * 8 * TN * 4)               # small [1,TN] rows (8-sublane pad)
    vmem_limit = int(min(max(2 * ws + (4 << 20), 32 << 20), 48 << 20))
    compiler_params = pltpu.CompilerParams(
        dimension_semantics=("parallel", "arbitrary"),
        vmem_limit_bytes=vmem_limit)

    if training:
        wsig = pad2(params["weight_sigma"].astype(cdt), out_p, in_p)
        # x * eps_in computed in f32, then cast/padded (O(B*K), negligible).
        xeps = pad2((x * params["weight_eps_in"][None, :]).astype(cdt), B_p, in_p)
        eps_out = pad_row(params["weight_eps_out"], out_p)            # f32
        bias = pad_row(params["bias_mu"]
                       + params["bias_sigma"] * params["bias_epsilon"], out_p)

        out_arr = pl.pallas_call(
            functools.partial(_noisy_linear_train_kernel, tk=TK),
            out_shape=out_shape,
            grid_spec=pltpu.PrefetchScalarGridSpec(
                num_scalar_prefetch=0,
                grid=grid,
                in_specs=[x_spec, x_spec, w_spec, w_spec, row_spec, row_spec],
                out_specs=o_spec,
                scratch_shapes=[pltpu.VMEM((B_p, TN), jnp.float32),
                                pltpu.VMEM((B_p, TN), jnp.float32)]),
            compiler_params=compiler_params,
        )(x_p, xeps, wmu, wsig, eps_out, bias)
    else:
        bias = pad_row(params["bias_mu"], out_p)
        out_arr = pl.pallas_call(
            functools.partial(_noisy_linear_eval_kernel, tk=TK),
            out_shape=out_shape,
            grid_spec=pltpu.PrefetchScalarGridSpec(
                num_scalar_prefetch=0,
                grid=grid,
                in_specs=[x_spec, w_spec, row_spec],
                out_specs=o_spec,
                scratch_shapes=[pltpu.VMEM((B_p, TN), jnp.float32)]),
            compiler_params=compiler_params,
        )(x_p, wmu, bias)

    return out_arr[:B, :out_features]


# ---------------------------------------------------------------------------
# Deterministic parameter / noise construction (mirrors __init__ +
# reset_parameters + reset_noise)
# ---------------------------------------------------------------------------
def transform_noise(x):
    # x.sign() * sqrt(|x|)
    return jnp.sign(x) * jnp.sqrt(jnp.abs(x))


def init_noisy_linear(key, in_features, out_features,
                      std_init=0.4, noisy_layer_std=0.1):
    k_wmu, k_bmu, k_nin, k_now, k_nob = jax.random.split(key, 5)
    mu_range = 1.0 / (in_features ** 0.5)

    weight_mu = jax.random.uniform(
        k_wmu, (out_features, in_features), jnp.float32, -mu_range, mu_range)
    weight_sigma = jnp.full((out_features, in_features),
                            std_init / (in_features ** 0.5), jnp.float32)
    bias_mu = jax.random.uniform(
        k_bmu, (out_features,), jnp.float32, -mu_range, mu_range)
    bias_sigma = jnp.full((out_features,),
                          std_init / (out_features ** 0.5), jnp.float32)

    # reset_noise: factorized Gaussian noise. The kernel consumes the factor
    # vectors; the materialized outer product is kept only so the pure-JAX
    # reference mirrors the PyTorch buffers exactly.
    noise_in = noisy_layer_std * jax.random.normal(k_nin, (in_features,), jnp.float32)
    noise_out_w = noisy_layer_std * jax.random.normal(k_now, (out_features,), jnp.float32)
    noise_out_b = noisy_layer_std * jax.random.normal(k_nob, (out_features,), jnp.float32)

    weight_eps_in = transform_noise(noise_in)
    weight_eps_out = transform_noise(noise_out_w)
    weight_epsilon = jnp.outer(weight_eps_out, weight_eps_in)   # reference only
    bias_epsilon = transform_noise(noise_out_b)

    return {
        "weight_mu": weight_mu,
        "weight_sigma": weight_sigma,
        "weight_epsilon": weight_epsilon,     # used only by the reference
        "weight_eps_in": weight_eps_in,       # kernel (factorized noise)
        "weight_eps_out": weight_eps_out,     # kernel (factorized noise)
        "bias_mu": bias_mu,
        "bias_sigma": bias_sigma,
        "bias_epsilon": bias_epsilon,
    }


# ---------------------------------------------------------------------------
# Pure-JAX reference (mirrors the PyTorch forward exactly)
# ---------------------------------------------------------------------------
def noisy_linear_ref(x, params, training=True):
    if training:
        w = params["weight_mu"] + params["weight_sigma"] * params["weight_epsilon"]
        b = params["bias_mu"] + params["bias_sigma"] * params["bias_epsilon"]
    else:
        w = params["weight_mu"]
        b = params["bias_mu"]
    return jnp.dot(x, w.T, precision=lax.Precision.HIGHEST) + b


if __name__ == "__main__":
    key = jax.random.PRNGKey(0)

    def check(B, IN, OUT, key):
        k_p, k_x = jax.random.split(key)
        params = init_noisy_linear(k_p, IN, OUT)
        x = jax.random.normal(k_x, (B, IN), jnp.float32)
        for training in (True, False):
            ref = noisy_linear_ref(x, params, training)
            # f32 streaming path. Tolerance covers possible bf16-pass MXU
            # precision on the DEFAULT dot path (typically agrees ~1e-5).
            y32 = jax.block_until_ready(
                noisy_linear_forward(x, params, training=training, use_bf16=False))
            assert y32.shape == (B, OUT)
            assert jnp.allclose(y32, ref, atol=1e-2, rtol=1e-2), (
                f"f32 mismatch (training={training}, B={B}, IN={IN}, OUT={OUT})")
            # bf16 streaming path (perf default).
            y16 = jax.block_until_ready(
                noisy_linear_forward(x, params, training=training, use_bf16=True))
            assert y16.shape == (B, OUT)
            assert jnp.allclose(y16, ref, atol=5e-2, rtol=5e-2), (
                f"bf16 mismatch (training={training}, B={B}, IN={IN}, OUT={OUT})")

    k1, k2, k3, key = jax.random.split(key, 4)
    # Small aligned shapes (out < 128 exercises lane padding of N).
    check(4, 128, 64, k1)
    # Ragged shapes exercising padding on every axis (single-tile grid).
    check(5, 300, 200, k2)
    # Multi-tile grid on both axes (K reduction loop + several N tiles).
    check(8, 640, 384, k3)

    print("KERNEL_OK")
</pallas_src>

<mosaic_0001>
module attributes {stable_mosaic.version = 11 : i64} {
  func.func @_noisy_linear_train_kernel(%arg0: i32, %arg1: i32, %arg2: memref<8x128xf32, #tpu.memory_space<vmem>>, %arg3: memref<8x128xf32, #tpu.memory_space<vmem>>, %arg4: memref<128x128xf32, #tpu.memory_space<vmem>>, %arg5: memref<128x128xf32, #tpu.memory_space<vmem>>, %arg6: memref<1x128xf32, #tpu.memory_space<vmem>>, %arg7: memref<1x128xf32, #tpu.memory_space<vmem>>, %arg8: memref<8x128xf32, #tpu.memory_space<vmem>>, %arg9: memref<8x128xf32, #tpu.memory_space<vmem>>, %arg10: memref<8x128xf32, #tpu.memory_space<vmem>>) attributes {dimension_semantics = [#tpu.dimension_semantics<parallel>, #tpu.dimension_semantics<arbitrary>], iteration_bounds = array<i64: 1, 1>, scalar_prefetch = 0 : i64, scratch_operands = 2 : i64, tpu.core_type = #tpu.core_type<tc>, window_params = [{pipeline_mode = #tpu.pipeline_mode<synchronous>, transform_indices = @transform_0, window_bounds = array<i64: 8, 128>}, {pipeline_mode = #tpu.pipeline_mode<synchronous>, transform_indices = @transform_1, window_bounds = array<i64: 8, 128>}, {transform_indices = @transform_2, window_bounds = array<i64: 128, 128>}, {transform_indices = @transform_3, window_bounds = array<i64: 128, 128>}, {transform_indices = @transform_4, window_bounds = array<i64: 1, 128>}, {transform_indices = @transform_5, window_bounds = array<i64: 1, 128>}, {transform_indices = @transform_6, window_bounds = array<i64: 8, 128>}]} {
    %c0_i32 = arith.constant 0 : i32
    %0 = arith.cmpi eq, %arg1, %c0_i32 : i32
    %1 = arith.extui %0 : i1 to i32
    %c0_i32_0 = arith.constant 0 : i32
    %2 = arith.cmpi ne, %1, %c0_i32_0 : i32
    scf.if %2 {
      %cst_17 = arith.constant 0.000000e+00 : f32
      %22 = vector.broadcast %cst_17 : f32 to vector<8x128xf32>
      %c0_18 = arith.constant 0 : index
      %c0_19 = arith.constant 0 : index
      %23 = vector.load %arg9[%c0_18, %c0_19] : memref<8x128xf32, #tpu.memory_space<vmem>>, vector<8x128xf32>
      tpu.vector_store %arg9[%c0_18, %c0_19], %22 {strides = array<i32>} : memref<8x128xf32, #tpu.memory_space<vmem>>, vector<8x128xf32>,
      %cst_20 = arith.constant 0.000000e+00 : f32
      %24 = vector.broadcast %cst_20 : f32 to vector<8x128xf32>
      %c0_21 = arith.constant 0 : index
      %c0_22 = arith.constant 0 : index
      %25 = vector.load %arg10[%c0_21, %c0_22] : memref<8x128xf32, #tpu.memory_space<vmem>>, vector<8x128xf32>
      tpu.vector_store %arg10[%c0_21, %c0_22], %24 {strides = array<i32>} : memref<8x128xf32, #tpu.memory_space<vmem>>, vector<8x128xf32>,
    } else {
    }
    %c128_i32 = arith.constant 128 : i32
    %3 = arith.muli %arg1, %c128_i32 : i32
    %4 = tpu.assume_multiple %3, 128 : i32
    %c0 = arith.constant 0 : index
    %5 = arith.index_cast %4 : i32 to index
    %6 = vector.load %arg2[%c0, %5] : memref<8x128xf32, #tpu.memory_space<vmem>>, vector<8x128xf32>
    %c0_1 = arith.constant 0 : index
    %7 = arith.index_cast %4 : i32 to index
    %8 = vector.load %arg3[%c0_1, %7] : memref<8x128xf32, #tpu.memory_space<vmem>>, vector<8x128xf32>
    %c0_2 = arith.constant 0 : index
    %c0_3 = arith.constant 0 : index
    %9 = vector.load %arg9[%c0_2, %c0_3] : memref<8x128xf32, #tpu.memory_space<vmem>>, vector<8x128xf32>
    %c0_4 = arith.constant 0 : index
    %c0_5 = arith.constant 0 : index
    %10 = vector.load %arg4[%c0_4, %c0_5] : memref<128x128xf32, #tpu.memory_space<vmem>>, vector<128x128xf32>
    %cst = arith.constant dense<0.000000e+00> : vector<8x128xf32>
    %11 = tpu.matmul %6, %10, %cst {dimension_numbers = #tpu.dot_dimension_numbers<[1], [1], [0], [0], [0, 0, 1, 0], [], []>} : vector<8x128xf32>, vector<128x128xf32>, vector<8x128xf32> -> vector<8x128xf32>
    %12 = arith.addf %9, %11 : vector<8x128xf32>
    %c0_6 = arith.constant 0 : index
    %c0_7 = arith.constant 0 : index
    %13 = vector.load %arg9[%c0_6, %c0_7] : memref<8x128xf32, #tpu.memory_space<vmem>>, vector<8x128xf32>
    tpu.vector_store %arg9[%c0_6, %c0_7], %12 {strides = array<i32>} : memref<8x128xf32, #tpu.memory_space<vmem>>, vector<8x128xf32>,
    %c0_8 = arith.constant 0 : index
    %c0_9 = arith.constant 0 : index
    %14 = vector.load %arg10[%c0_8, %c0_9] : memref<8x128xf32, #tpu.memory_space<vmem>>, vector<8x128xf32>
    %c0_10 = arith.constant 0 : index
    %c0_11 = arith.constant 0 : index
    %15 = vector.load %arg5[%c0_10, %c0_11] : memref<128x128xf32, #tpu.memory_space<vmem>>, vector<128x128xf32>
    %cst_12 = arith.constant dense<0.000000e+00> : vector<8x128xf32>
    %16 = tpu.matmul %8, %15, %cst_12 {dimension_numbers = #tpu.dot_dimension_numbers<[1], [1], [0], [0], [0, 0, 1, 0], [], []>} : vector<8x128xf32>, vector<128x128xf32>, vector<8x128xf32> -> vector<8x128xf32>
    %17 = arith.addf %14, %16 : vector<8x128xf32>
    %c0_13 = arith.constant 0 : index
    %c0_14 = arith.constant 0 : index
    %18 = vector.load %arg10[%c0_13, %c0_14] : memref<8x128xf32, #tpu.memory_space<vmem>>, vector<8x128xf32>
    tpu.vector_store %arg10[%c0_13, %c0_14], %17 {strides = array<i32>} : memref<8x128xf32, #tpu.memory_space<vmem>>, vector<8x128xf32>,
    %c0_i32_15 = arith.constant 0 : i32
    %19 = arith.cmpi eq, %arg1, %c0_i32_15 : i32
    %20 = arith.extui %19 : i1 to i32
    %c0_i32_16 = arith.constant 0 : i32
    %21 = arith.cmpi ne, %20, %c0_i32_16 : i32
    scf.if %21 {
      %c0_17 = arith.constant 0 : index
      %c0_18 = arith.constant 0 : index
      %22 = vector.load %arg9[%c0_17, %c0_18] : memref<8x128xf32, #tpu.memory_space<vmem>>, vector<8x128xf32>
      %c0_19 = arith.constant 0 : index
      %c0_20 = arith.constant 0 : index
      %23 = vector.load %arg6[%c0_19, %c0_20] : memref<1x128xf32, #tpu.memory_space<vmem>>, vector<1x128xf32>
      %c0_21 = arith.constant 0 : index
      %c0_22 = arith.constant 0 : index
      %24 = vector.load %arg10[%c0_21, %c0_22] : memref<8x128xf32, #tpu.memory_space<vmem>>, vector<8x128xf32>
      %25 = vector.broadcast %23 : vector<1x128xf32> to vector<8x128xf32>
      %26 = arith.mulf %25, %24 : vector<8x128xf32>
      %27 = arith.addf %22, %26 : vector<8x128xf32>
      %c0_23 = arith.constant 0 : index
      %c0_24 = arith.constant 0 : index
      %28 = vector.load %arg7[%c0_23, %c0_24] : memref<1x128xf32, #tpu.memory_space<vmem>>, vector<1x128xf32>
      %29 = vector.broadcast %28 : vector<1x128xf32> to vector<8x128xf32>
      %30 = arith.addf %27, %29 : vector<8x128xf32>
      %c0_25 = arith.constant 0 : index
      %c0_26 = arith.constant 0 : index
      %31 = vector.load %arg8[%c0_25, %c0_26] : memref<8x128xf32, #tpu.memory_space<vmem>>, vector<8x128xf32>
      tpu.vector_store %arg8[%c0_25, %c0_26], %30 {strides = array<i32>} : memref<8x128xf32, #tpu.memory_space<vmem>>, vector<8x128xf32>,
    } else {
    }
    return
  }
  func.func @transform_0(%arg0: i32, %arg1: i32) -> (i32, i32) {
    %c0_i32 = arith.constant 0 : i32
    %c0_i32_0 = arith.constant 0 : i32
    %c0_i32_1 = arith.constant 0 : i32
    return %c0_i32, %c0_i32_0 : i32, i32
  }
  func.func @transform_1(%arg0: i32, %arg1: i32) -> (i32, i32) {
    %c0_i32 = arith.constant 0 : i32
    %c0_i32_0 = arith.constant 0 : i32
    %c0_i32_1 = arith.constant 0 : i32
    return %c0_i32, %c0_i32_0 : i32, i32
  }
  func.func @transform_2(%arg0: i32, %arg1: i32) -> (i32, i32) {
    %c0_i32 = arith.constant 0 : i32
    return %arg0, %arg1 : i32, i32
  }
  func.func @transform_3(%arg0: i32, %arg1: i32) -> (i32, i32) {
    %c0_i32 = arith.constant 0 : i32
    return %arg0, %arg1 : i32, i32
  }
  func.func @transform_4(%arg0: i32, %arg1: i32) -> (i32, i32) {
    %c0_i32 = arith.constant 0 : i32
    %c0_i32_0 = arith.constant 0 : i32
    return %c0_i32, %arg0 : i32, i32
  }
  func.func @transform_5(%arg0: i32, %arg1: i32) -> (i32, i32) {
    %c0_i32 = arith.constant 0 : i32
    %c0_i32_0 = arith.constant 0 : i32
    return %c0_i32, %arg0 : i32, i32
  }
  func.func @transform_6(%arg0: i32, %arg1: i32) -> (i32, i32) {
    %c0_i32 = arith.constant 0 : i32
    %c0_i32_0 = arith.constant 0 : i32
    return %c0_i32, %arg0 : i32, i32
  }
}

</mosaic_0001>

<llo_original>
// kernel: noisy_linear_forward.1
$region0: #{noisy_linear_forward.1}
  #allocation0 [shape = 'u32[]', space=smem, size = 0x4, offset = 0x4, fixed_abs, tag = 'smem constant byte address 0x4 - core index']
  #allocation1 [shape = 'u32[144,128]{1,0:T(1,128)}', space=vmem, size = 0x12000, scoped, tag = 'internal scratch']
  #allocation2 [shape = 'f32[8,128]{1,0:T(8,128)}', space=vmem, size = 0x1000, scoped, tag = 'scratch operand']
  #allocation3 [shape = 'f32[8,128]{1,0:T(8,128)}', space=vmem, size = 0x1000, scoped, tag = 'scratch operand']
  %s0 = inlined_call_operand.vmem [shape: f32[8,128], index: 0, kind: input, shape index: {}]
  %s1 = inlined_call_operand.vmem [shape: f32[8,128], index: 1, kind: input, shape index: {}]
  %s2 = inlined_call_operand.vmem [shape: f32[128,128], index: 2, kind: input, shape index: {}]
  %s3 = inlined_call_operand.vmem [shape: f32[128,128], index: 3, kind: input, shape index: {}]
  %s4 = inlined_call_operand.vmem [shape: f32[1,128], index: 4, kind: input, shape index: {}]
  %s5 = inlined_call_operand.vmem [shape: f32[1,128], index: 5, kind: input, shape index: {}]
  %s6 = inlined_call_operand.vmem [shape: f32[8,128], index: 6, kind: output, shape index: {}]
  %s7 = sld [smem:[#allocation0]]
  $region42: #{noisy_linear_forward.1} parent=0
    _
  %s9 = ssub.s32 1, %s7
  %s10 = scalar_select 0, %s9, %s7
  // Predicated region
  $region2: #{noisy_linear_forward.1} parent=0 // pred_check
    _
  $region3: #{noisy_linear_forward.1} parent=0 // pred_check_branch
    %12 = sbr.rel (0) target = $region5
  $region4: #{noisy_linear_forward.1} parent=0 // pred_region
    _
  $region5: #{noisy_linear_forward.1} parent=0 // pred_fallthru
    _
  // Predicated region
  $region6: #{noisy_linear_forward.1} parent=0 // pred_check
    _
  $region7: #{noisy_linear_forward.1} parent=0 // pred_check_branch
    %14 = sbr.rel (0) target = $region9
  $region8: #{noisy_linear_forward.1} parent=0 // pred_region
    _
  $region9: #{noisy_linear_forward.1} parent=0 // pred_fallthru
    _
  // Predicated region
  $region10: #{noisy_linear_forward.1} parent=0 // pred_check
    _
  $region11: #{noisy_linear_forward.1} parent=0 // pred_check_branch
    %16 = sbr.rel (0) target = $region13
  $region12: #{noisy_linear_forward.1} parent=0 // pred_region
    _
  $region13: #{noisy_linear_forward.1} parent=0 // pred_fallthru
    _
  // Predicated region
  $region14: #{noisy_linear_forward.1} parent=0 // pred_check
    _
  $region15: #{noisy_linear_forward.1} parent=0 // pred_check_branch
    %18 = sbr.rel (0) target = $region17
  $region16: #{noisy_linear_forward.1} parent=0 // pred_region
    _
  $region17: #{noisy_linear_forward.1} parent=0 // pred_fallthru
    _
  // Predicated region
  $region18: #{noisy_linear_forward.1} parent=0 // pred_check
    _
  $region19: #{noisy_linear_forward.1} parent=0 // pred_check_branch
    %20 = sbr.rel (0) target = $region21
  $region20: #{noisy_linear_forward.1} parent=0 // pred_region
    _
  $region21: #{noisy_linear_forward.1} parent=0 // pred_fallthru
    _
  // Predicated region
  $region22: #{noisy_linear_forward.1} parent=0 // pred_check
    _
  $region23: #{noisy_linear_forward.1} parent=0 // pred_check_branch
    %22 = sbr.rel (0) target = $region25
  $region24: #{noisy_linear_forward.1} parent=0 // pred_region
    _
  $region25: #{noisy_linear_forward.1} parent=0 // pred_fallthru
    _
  %p23 = scmp.eq.s32.totalorder 0, 0
  // Predicated region
  $region26: #{noisy_linear_forward.1} parent=0 // pred_check
    %p24 = pneg %p23
  $region27: #{noisy_linear_forward.1} parent=0 // pred_check_branch
    %26 = sbr.rel (%p24) target = $region29
  $region28: #{noisy_linear_forward.1} parent=0 // pred_region
    %27 = vst [vmem:[#allocation2] sm:$0xff] 0.0
    %28 = vst [vmem:[#allocation3] sm:$0xff] 0.0
  $region29: #{noisy_linear_forward.1} parent=0 // pred_fallthru
    _
  %s29 = smul.u32 0, 128
  %s30 = sshra.s32 %s29, 7
  %s31 = sand.u32 %s29, 127
  %s32 = scalar_lea.vmem %s0, %s30
  %v33 = vld [vmem:[%s32] sm:$0xff]
  %s34 = scalar_lea.vmem %s1, %s30
  %v35 = vld [vmem:[%s34] sm:$0xff]
  %v36 = vld [vmem:[#allocation2] sm:$0xff]
  %v37 = vld [vmem:[%s2] sm:$0xff]
  %v38 = vld [vmem:[%s2 + $0x8] sm:$0xff]
  %v39 = vld [vmem:[%s2 + $0x10] sm:$0xff]
  %v40 = vld [vmem:[%s2 + $0x18] sm:$0xff]
  %v41 = vld [vmem:[%s2 + $0x20] sm:$0xff]
  %v42 = vld [vmem:[%s2 + $0x28] sm:$0xff]
  %v43 = vld [vmem:[%s2 + $0x30] sm:$0xff]
  %v44 = vld [vmem:[%s2 + $0x38] sm:$0xff]
  %v45 = vld [vmem:[%s2 + $0x40] sm:$0xff]
  %v46 = vld [vmem:[%s2 + $0x48] sm:$0xff]
  %v47 = vld [vmem:[%s2 + $0x50] sm:$0xff]
  %v48 = vld [vmem:[%s2 + $0x58] sm:$0xff]
  %v49 = vld [vmem:[%s2 + $0x60] sm:$0xff]
  %v50 = vld [vmem:[%s2 + $0x68] sm:$0xff]
  %v51 = vld [vmem:[%s2 + $0x70] sm:$0xff]
  %v52 = vld [vmem:[%s2 + $0x78] sm:$0xff]
  %53 = vmatprep.subr.mxu0 0.0
  %54 = vmatpush1.xpose.msra.mxu0 %v52
  %55 = vmatprep.subr.mxu0 0.0
  %56 = vmatpush1.xpose.msra.mxu0 %v51
  %57 = vmatprep.subr.mxu0 0.0
  %58 = vmatpush1.xpose.msra.mxu0 %v50
  %59 = vmatprep.subr.mxu0 0.0
  %60 = vmatpush1.xpose.msra.mxu0 %v49
  %61 = vmatprep.subr.mxu0 0.0
  %62 = vmatpush1.xpose.msra.mxu0 %v48
  %63 = vmatprep.subr.mxu0 0.0
  %64 = vmatpush1.xpose.msra.mxu0 %v47
  %65 = vmatprep.subr.mxu0 0.0
  %66 = vmatpush1.xpose.msra.mxu0 %v46
  %67 = vmatprep.subr.mxu0 0.0
  %68 = vmatpush1.xpose.msra.mxu0 %v45
  %69 = vmatprep.subr.mxu0 0.0
  %70 = vmatpush1.xpose.msra.mxu0 %v44
  %71 = vmatprep.subr.mxu0 0.0
  %72 = vmatpush1.xpose.msra.mxu0 %v43
  %73 = vmatprep.subr.mxu0 0.0
  %74 = vmatpush1.xpose.msra.mxu0 %v42
  %75 = vmatprep.subr.mxu0 0.0
  %76 = vmatpush1.xpose.msra.mxu0 %v41
  %77 = vmatprep.subr.mxu0 0.0
  %78 = vmatpush1.xpose.msra.mxu0 %v40
  %79 = vmatprep.subr.mxu0 0.0
  %80 = vmatpush1.xpose.msra.mxu0 %v39
  %81 = vmatprep.subr.mxu0 0.0
  %82 = vmatpush1.xpose.msra.mxu0 %v38
  %83 = vmatprep.subr.mxu0 0.0
  %84 = vmatpush1.xpose.msra.mxu0 %v37
  %85 = vmatprep.subr.mxu0 0.0
  %86 = vmatpush2.xpose.msra.mxu0 0.0
  %87 = vmatprep.subr.mxu0 0.0
  %88 = vmatpush2.xpose.msra.mxu0 0.0
  %89 = vmatprep.subr.mxu0 0.0
  %90 = vmatpush2.xpose.msra.mxu0 0.0
  %91 = vmatprep.subr.mxu0 0.0
  %92 = vmatpush2.xpose.msra.mxu0 0.0
  %93 = vmatprep.subr.mxu0 0.0
  %94 = vmatpush2.xpose.msra.mxu0 0.0
  %95 = vmatprep.subr.mxu0 0.0
  %96 = vmatpush2.xpose.msra.mxu0 0.0
  %97 = vmatprep.subr.mxu0 0.0
  %98 = vmatpush2.xpose.msra.mxu0 0.0
  %99 = vmatprep.subr.mxu0 0.0
  %100 = vmatpush2.xpose.msra.mxu0 0.0
  %101 = vmatprep.subr.mxu0 0.0
  %102 = vmatpush2.xpose.msra.mxu0 0.0
  %103 = vmatprep.subr.mxu0 0.0
  %104 = vmatpush2.xpose.msra.mxu0 0.0
  %105 = vmatprep.subr.mxu0 0.0
  %106 = vmatpush2.xpose.msra.mxu0 0.0
  %107 = vmatprep.subr.mxu0 0.0
  %108 = vmatpush2.xpose.msra.mxu0 0.0
  %109 = vmatprep.subr.mxu0 0.0
  %110 = vmatpush2.xpose.msra.mxu0 0.0
  %111 = vmatprep.subr.mxu0 0.0
  %112 = vmatpush2.xpose.msra.mxu0 0.0
  %113 = vmatprep.subr.mxu0 0.0
  %114 = vmatpush2.xpose.msra.mxu0 0.0
  %115 = vmatprep.subr.mxu0 0.0
  %116 = vmatpush2.xpose.msra.mxu0 0.0
  %117 = vmatprep.mubr.f32.mxu0 0.0
  %118 = vmatmul.mubr.f32.gmra.mxu0 %v33
  %v119 = vpop.f32.mrf.mxu0
  %v120 = vadd.f32 0.0, %v119
  %v121 = vpop.f32.mrf.mxu0
  %122 = vdwg.mxu0
  %v123 = vadd.f32 %v36, %v120
  %124 = vst [vmem:[#allocation2] sm:$0xff] %v123
  %v125 = vld [vmem:[#allocation3] sm:$0xff]
  %v126 = vld [vmem:[%s3] sm:$0xff]
  %v127 = vld [vmem:[%s3 + $0x8] sm:$0xff]
  %v128 = vld [vmem:[%s3 + $0x10] sm:$0xff]
  %v129 = vld [vmem:[%s3 + $0x18] sm:$0xff]
  %v130 = vld [vmem:[%s3 + $0x20] sm:$0xff]
  %v131 = vld [vmem:[%s3 + $0x28] sm:$0xff]
  %v132 = vld [vmem:[%s3 + $0x30] sm:$0xff]
  %v133 = vld [vmem:[%s3 + $0x38] sm:$0xff]
  %v134 = vld [vmem:[%s3 + $0x40] sm:$0xff]
  %v135 = vld [vmem:[%s3 + $0x48] sm:$0xff]
  %v136 = vld [vmem:[%s3 + $0x50] sm:$0xff]
  %v137 = vld [vmem:[%s3 + $0x58] sm:$0xff]
  %v138 = vld [vmem:[%s3 + $0x60] sm:$0xff]
  %v139 = vld [vmem:[%s3 + $0x68] sm:$0xff]
  %v140 = vld [vmem:[%s3 + $0x70] sm:$0xff]
  %v141 = vld [vmem:[%s3 + $0x78] sm:$0xff]
  %142 = vmatprep.subr.mxu0 0.0
  %143 = vmatpush1.xpose.msra.mxu0 %v141
  %144 = vmatprep.subr.mxu0 0.0
  %145 = vmatpush1.xpose.msra.mxu0 %v140
  %146 = vmatprep.subr.mxu0 0.0
  %147 = vmatpush1.xpose.msra.mxu0 %v139
  %148 = vmatprep.subr.mxu0 0.0
  %149 = vmatpush1.xpose.msra.mxu0 %v138
  %150 = vmatprep.subr.mxu0 0.0
  %151 = vmatpush1.xpose.msra.mxu0 %v137
  %152 = vmatprep.subr.mxu0 0.0
  %153 = vmatpush1.xpose.msra.mxu0 %v136
  %154 = vmatprep.subr.mxu0 0.0
  %155 = vmatpush1.xpose.msra.mxu0 %v135
  %156 = vmatprep.subr.mxu0 0.0
  %157 = vmatpush1.xpose.msra.mxu0 %v134
  %158 = vmatprep.subr.mxu0 0.0
  %159 = vmatpush1.xpose.msra.mxu0 %v133
  %160 = vmatprep.subr.mxu0 0.0
  %161 = vmatpush1.xpose.msra.mxu0 %v132
  %162 = vmatprep.subr.mxu0 0.0
  %163 = vmatpush1.xpose.msra.mxu0 %v131
  %164 = vmatprep.subr.mxu0 0.0
  %165 = vmatpush1.xpose.msra.mxu0 %v130
  %166 = vmatprep.subr.mxu0 0.0
  %167 = vmatpush1.xpose.msra.mxu0 %v129
  %168 = vmatprep.subr.mxu0 0.0
  %169 = vmatpush1.xpose.msra.mxu0 %v128
  %170 = vmatprep.subr.mxu0 0.0
  %171 = vmatpush1.xpose.msra.mxu0 %v127
  %172 = vmatprep.subr.mxu0 0.0
  %173 = vmatpush1.xpose.msra.mxu0 %v126
  %174 = vmatprep.subr.mxu0 0.0
  %175 = vmatpush2.xpose.msra.mxu0 0.0
  %176 = vmatprep.subr.mxu0 0.0
  %177 = vmatpush2.xpose.msra.mxu0 0.0
  %178 = vmatprep.subr.mxu0 0.0
  %179 = vmatpush2.xpose.msra.mxu0 0.0
  %180 = vmatprep.subr.mxu0 0.0
  %181 = vmatpush2.xpose.msra.mxu0 0.0
  %182 = vmatprep.subr.mxu0 0.0
  %183 = vmatpush2.xpose.msra.mxu0 0.0
  %184 = vmatprep.subr.mxu0 0.0
  %185 = vmatpush2.xpose.msra.mxu0 0.0
  %186 = vmatprep.subr.mxu0 0.0
  %187 = vmatpush2.xpose.msra.mxu0 0.0
  %188 = vmatprep.subr.mxu0 0.0
  %189 = vmatpush2.xpose.msra.mxu0 0.0
  %190 = vmatprep.subr.mxu0 0.0
  %191 = vmatpush2.xpose.msra.mxu0 0.0
  %192 = vmatprep.subr.mxu0 0.0
  %193 = vmatpush2.xpose.msra.mxu0 0.0
  %194 = vmatprep.subr.mxu0 0.0
  %195 = vmatpush2.xpose.msra.mxu0 0.0
  %196 = vmatprep.subr.mxu0 0.0
  %197 = vmatpush2.xpose.msra.mxu0 0.0
  %198 = vmatprep.subr.mxu0 0.0
  %199 = vmatpush2.xpose.msra.mxu0 0.0
  %200 = vmatprep.subr.mxu0 0.0
  %201 = vmatpush2.xpose.msra.mxu0 0.0
  %202 = vmatprep.subr.mxu0 0.0
  %203 = vmatpush2.xpose.msra.mxu0 0.0
  %204 = vmatprep.subr.mxu0 0.0
  %205 = vmatpush2.xpose.msra.mxu0 0.0
  %206 = vmatprep.mubr.f32.mxu0 0.0
  %207 = vmatmul.mubr.f32.gmra.mxu0 %v35
  %v208 = vpop.f32.mrf.mxu0
  %v209 = vadd.f32 0.0, %v208
  %v210 = vpop.f32.mrf.mxu0
  %211 = vdwg.mxu0
  %v212 = vadd.f32 %v125, %v209
  %213 = vst [vmem:[#allocation3] sm:$0xff] %v212
  // Predicated region
  $region30: #{noisy_linear_forward.1} parent=0 // pred_check
    %p214 = pneg %p23
  $region31: #{noisy_linear_forward.1} parent=0 // pred_check_branch
    %216 = sbr.rel (%p214) target = $region33
  $region32: #{noisy_linear_forward.1} parent=0 // pred_region
    %v217 = vld [vmem:[#allocation2] sm:$0xff]
    %v218 = vld [vmem:[%s4] sm:$0x1]
    %v219 = vld [vmem:[#allocation3] sm:$0xff]
    %v221 = vlaneseq
    %v222 = vshrl.u32 %v221, 7
    %v223 = vsub.s32 0, %v222
    %v224 = vrot.slane %v218, %v223
    %v226 = vmul.f32 %v224, %v219
    %v227 = vadd.f32 %v217, %v226
    %v228 = vld [vmem:[%s5] sm:$0x1]
    %v230 = vlaneseq
    %v231 = vshrl.u32 %v230, 7
    %v232 = vsub.s32 0, %v231
    %v233 = vrot.slane %v228, %v232
    %v235 = vadd.f32 %v227, %v233
    %236 = vst [vmem:[%s6] sm:$0xff] %v235
  $region33: #{noisy_linear_forward.1} parent=0 // pred_fallthru
    _
  // Predicated region
  $region34: #{noisy_linear_forward.1} parent=0 // pred_check
    _
  $region35: #{noisy_linear_forward.1} parent=0 // pred_check_branch
    %238 = sbr.rel (0) target = $region37
  $region36: #{noisy_linear_forward.1} parent=0 // pred_region
    _
  $region37: #{noisy_linear_forward.1} parent=0 // pred_fallthru
    _
  // Predicated region
  $region38: #{noisy_linear_forward.1} parent=0 // pred_check
    _
  $region39: #{noisy_linear_forward.1} parent=0 // pred_check_branch
    %240 = sbr.rel (0) target = $region41
  $region40: #{noisy_linear_forward.1} parent=0 // pred_region
    _
  $region41: #{noisy_linear_forward.1} parent=0 // pred_fallthru
    _

</llo_original>
